<compile_context>
chip_gen: v6e
topology: v6e:2x2x1
jax: 0.10.0
libtpu: 0.0.40
codegen_flags: <defaults>
</compile_context>

<pallas_src>
from functools import partial

import jax
import jax.numpy as jnp
from jax.experimental import pallas as pl
from jax.experimental.pallas import tpu as pltpu


def _iou_loss_kernel(n_ref, boxes_ref, out_ref, *, loss_type, tile_r):
    blk_boxes = tile_r * 128
    blk_start = pl.program_id(0) * blk_boxes
    n_valid = n_ref[0]

    b = boxes_ref[...]          # (8, tile_r, 128) f32
    p = b[0:4]                  # pred   x1, y1, x2, y2   (4, tile_r, 128)
    t = b[4:8]                  # target x1, y1, x2, y2   (4, tile_r, 128)

    # One full-block max/min gives every corner we need:
    #   mx[0],mx[1] = intersection x1,y1    mx[2],mx[3] = enclose x2,y2
    #   mn[0],mn[1] = enclose x1,y1         mn[2],mn[3] = intersection x2,y2
    mx = jnp.maximum(p, t)
    mn = jnp.minimum(p, t)

    area1 = (p[2:3] - p[0:1]) * (p[3:4] - p[1:2])
    area2 = (t[2:3] - t[0:1]) * (t[3:4] - t[1:2])
    inter_area = (jnp.maximum(mn[2:3] - mx[0:1], 0.0) *
                  jnp.maximum(mn[3:4] - mx[1:2], 0.0))
    union_area = area1 + area2 - inter_area

    def partial_sum(mask):
        # `mask is None` → block is entirely valid: no select/safe-divide work.
        safe_union = union_area if mask is None else jnp.where(mask, union_area, 1.0)
        iou = inter_area / safe_union

        if loss_type == 'iou':
            val = iou
        elif loss_type == 'giou':
            enclose_area = (mx[2:3] - mn[0:1]) * (mx[3:4] - mn[1:2])
            # NOTE: faithful to the reference module's (non-standard) GIoU:
            #   union' = area1 + area2 - iou * enclose_area
            union_g = area1 + area2 - iou * enclose_area
            safe_enc = enclose_area if mask is None else jnp.where(mask, enclose_area, 1.0)
            val = iou - (enclose_area - union_g) / safe_enc
        elif loss_type == 'diou':
            dcx = (p[0:1] + p[2:3]) - (t[0:1] + t[2:3])   # 2*(c1x - c2x)
            dcy = (p[1:2] + p[3:4]) - (t[1:2] + t[3:4])   # 2*(c1y - c2y)
            center_dist = (dcx * dcx + dcy * dcy) * 0.25
            ew = mx[2:3] - mn[0:1]
            eh = mx[3:4] - mn[1:2]
            diag = ew * ew + eh * eh
            safe_diag = diag if mask is None else jnp.where(mask, diag, 1.0)
            val = iou - center_dist / safe_diag
        else:
            raise ValueError(f"unknown loss_type {loss_type!r}")

        if mask is not None:
            val = jnp.where(mask, val, 0.0)

        # Fold (tile_r, 128) → (8, 128) vector partial: vreg-aligned reshape +
        # lane-parallel adds (no cross-lane XLU reduce inside the hot loop).
        return val.reshape(tile_r // 8, 8, 128).sum(axis=0).reshape(1, 8, 128)

    is_full = blk_start + blk_boxes <= n_valid

    @pl.when(is_full)
    def _():
        out_ref[...] = partial_sum(None)

    @pl.when(jnp.logical_not(is_full))
    def _():
        row = jax.lax.broadcasted_iota(jnp.int32, (1, tile_r, 128), 1)
        lane = jax.lax.broadcasted_iota(jnp.int32, (1, tile_r, 128), 2)
        mask = (blk_start + row * 128 + lane) < n_valid
        out_ref[...] = partial_sum(mask)


def iou_loss(pred_boxes, target_boxes, loss_type='iou'):
    """Pallas equivalent of IoULoss(loss_type)(pred_boxes, target_boxes)."""
    assert pred_boxes.shape == target_boxes.shape and pred_boxes.shape[-1] == 4
    n = pred_boxes.shape[0]

    BOX_ALIGN = 1024            # 8 sublanes * 128 lanes
    MAX_BOXES_PER_BLOCK = 8192  # 256 KiB / input block (x2 for double-buffering)

    boxes_per_block = min(MAX_BOXES_PER_BLOCK,
                          ((n + BOX_ALIGN - 1) // BOX_ALIGN) * BOX_ALIGN)
    n_pad = ((n + boxes_per_block - 1) // boxes_per_block) * boxes_per_block
    num_blocks = n_pad // boxes_per_block
    tile_r = boxes_per_block // 128

    # Pack pred (rows 0..3) and target (rows 4..7) into a single dense tile:
    # box g lives at [:, g // 128, g % 128].
    # TODO(synk): produce this packed layout upstream to skip the pad/transpose.
    both = jnp.concatenate([pred_boxes.astype(jnp.float32),
                            target_boxes.astype(jnp.float32)], axis=1)   # (n, 8)
    both = jnp.pad(both, ((0, n_pad - n), (0, 0)))                       # (n_pad, 8)
    packed = both.T.reshape(8, n_pad // 128, 128)

    n_arr = jnp.array([n], dtype=jnp.int32)
    kernel = partial(_iou_loss_kernel, loss_type=loss_type, tile_r=tile_r)

    partials = pl.pallas_call(
        kernel,
        out_shape=jax.ShapeDtypeStruct((num_blocks, 8, 128), jnp.float32),
        grid_spec=pltpu.PrefetchScalarGridSpec(
            num_scalar_prefetch=1,
            grid=(num_blocks,),
            in_specs=[pl.BlockSpec((8, tile_r, 128), lambda i, n_s: (0, i, 0))],
            out_specs=pl.BlockSpec((1, 8, 128), lambda i, n_s: (i, 0, 0)),
        ),
        compiler_params=pltpu.CompilerParams(
            dimension_semantics=("parallel",)),
    )(n_arr, packed)

    return 1.0 - jnp.sum(partials) / jnp.float32(n)


def _reference_iou_loss(pred, target, loss_type='iou'):
    """Pure-JAX reference mirroring the PyTorch module, for sanity checking."""
    px1, py1, px2, py2 = pred[:, 0], pred[:, 1], pred[:, 2], pred[:, 3]
    tx1, ty1, tx2, ty2 = target[:, 0], target[:, 1], target[:, 2], target[:, 3]
    inter = (jnp.clip(jnp.minimum(px2, tx2) - jnp.maximum(px1, tx1), 0, None) *
             jnp.clip(jnp.minimum(py2, ty2) - jnp.maximum(py1, ty1), 0, None))
    a1 = (px2 - px1) * (py2 - py1)
    a2 = (tx2 - tx1) * (ty2 - ty1)
    iou = inter / (a1 + a2 - inter)
    if loss_type == 'iou':
        return 1 - iou.mean()
    ex1, ey1 = jnp.minimum(px1, tx1), jnp.minimum(py1, ty1)
    ex2, ey2 = jnp.maximum(px2, tx2), jnp.maximum(py2, ty2)
    ea = (ex2 - ex1) * (ey2 - ey1)
    if loss_type == 'giou':
        ua = a1 + a2 - iou * ea
        return 1 - (iou - (ea - ua) / ea).mean()
    cd = (((px1 + px2) - (tx1 + tx2)) / 2) ** 2 + (((py1 + py2) - (ty1 + ty2)) / 2) ** 2
    dd = (ex2 - ex1) ** 2 + (ey2 - ey1) ** 2
    return 1 - (iou - cd / dd).mean()


def _make_boxes(key, n):
    k1, k2 = jax.random.split(key)
    xy1 = jax.random.uniform(k1, (n, 2), minval=0.0, maxval=0.5)
    wh = jax.random.uniform(k2, (n, 2), minval=0.1, maxval=0.5)
    return jnp.concatenate([xy1, xy1 + wh], axis=1).astype(jnp.float32)


if __name__ == "__main__":
    key = jax.random.PRNGKey(0)
    kp, kt = jax.random.split(key)

    ok = True
    # n=8 exercises the masked (partial) block path; n=1024 the unmasked
    # full-block path (boxes_per_block == 1024 there).
    for n in (8, 1024):
        kpn, ktn = jax.random.fold_in(kp, n), jax.random.fold_in(kt, n)
        pred_boxes = _make_boxes(kpn, n)
        target_boxes = _make_boxes(ktn, n)
        for lt in ('iou', 'giou', 'diou'):
            loss = iou_loss(pred_boxes, target_boxes, loss_type=lt)
            loss = jax.block_until_ready(loss)
            ref = _reference_iou_loss(pred_boxes, target_boxes, loss_type=lt)
            if not jnp.allclose(loss, ref, atol=1e-5, rtol=1e-5):
                ok = False
                print(f"MISMATCH n={n} {lt}: kernel={loss} ref={ref}")

    if ok:
        print("KERNEL_OK")
</pallas_src>

<mosaic_0001>
module attributes {stable_mosaic.version = 11 : i64} {
  func.func @_iou_loss_kernel(%arg0: i32, %arg1: memref<1xi32, #tpu.memory_space<smem>>, %arg2: memref<8x8x128xf32, #tpu.memory_space<vmem>>, %arg3: memref<1x8x128xf32, #tpu.memory_space<vmem>>) attributes {dimension_semantics = [#tpu.dimension_semantics<parallel>], iteration_bounds = array<i64: 1>, scalar_prefetch = 1 : i64, scratch_operands = 0 : i64, tpu.core_type = #tpu.core_type<tc>, window_params = [{transform_indices = @transform_0, window_bounds = array<i64: 8, 8, 128>}, {transform_indices = @transform_1, window_bounds = array<i64: 1, 8, 128>}]} {
    %c1024_i32 = arith.constant 1024 : i32
    %0 = arith.muli %arg0, %c1024_i32 : i32
    %c0 = arith.constant 0 : index
    %1 = memref.load %arg1[%c0] : memref<1xi32, #tpu.memory_space<smem>>
    %c0_0 = arith.constant 0 : index
    %c0_1 = arith.constant 0 : index
    %c0_2 = arith.constant 0 : index
    %2 = vector.load %arg2[%c0_0, %c0_1, %c0_2] : memref<8x8x128xf32, #tpu.memory_space<vmem>>, vector<8x8x128xf32>
    %3 = vector.extract_strided_slice %2 {offsets = [0, 0, 0], sizes = [4, 8, 128], strides = [1, 1, 1]} : vector<8x8x128xf32> to vector<4x8x128xf32>
    %4 = vector.extract_strided_slice %2 {offsets = [4, 0, 0], sizes = [4, 8, 128], strides = [1, 1, 1]} : vector<8x8x128xf32> to vector<4x8x128xf32>
    %5 = arith.maximumf %3, %4 : vector<4x8x128xf32>
    %6 = arith.minimumf %3, %4 : vector<4x8x128xf32>
    %7 = vector.extract_strided_slice %3 {offsets = [2, 0, 0], sizes = [1, 8, 128], strides = [1, 1, 1]} : vector<4x8x128xf32> to vector<1x8x128xf32>
    %8 = vector.extract_strided_slice %3 {offsets = [0, 0, 0], sizes = [1, 8, 128], strides = [1, 1, 1]} : vector<4x8x128xf32> to vector<1x8x128xf32>
    %9 = arith.subf %7, %8 : vector<1x8x128xf32>
    %10 = vector.extract_strided_slice %3 {offsets = [3, 0, 0], sizes = [1, 8, 128], strides = [1, 1, 1]} : vector<4x8x128xf32> to vector<1x8x128xf32>
    %11 = vector.extract_strided_slice %3 {offsets = [1, 0, 0], sizes = [1, 8, 128], strides = [1, 1, 1]} : vector<4x8x128xf32> to vector<1x8x128xf32>
    %12 = arith.subf %10, %11 : vector<1x8x128xf32>
    %13 = arith.mulf %9, %12 : vector<1x8x128xf32>
    %14 = vector.extract_strided_slice %4 {offsets = [2, 0, 0], sizes = [1, 8, 128], strides = [1, 1, 1]} : vector<4x8x128xf32> to vector<1x8x128xf32>
    %15 = vector.extract_strided_slice %4 {offsets = [0, 0, 0], sizes = [1, 8, 128], strides = [1, 1, 1]} : vector<4x8x128xf32> to vector<1x8x128xf32>
    %16 = arith.subf %14, %15 : vector<1x8x128xf32>
    %17 = vector.extract_strided_slice %4 {offsets = [3, 0, 0], sizes = [1, 8, 128], strides = [1, 1, 1]} : vector<4x8x128xf32> to vector<1x8x128xf32>
    %18 = vector.extract_strided_slice %4 {offsets = [1, 0, 0], sizes = [1, 8, 128], strides = [1, 1, 1]} : vector<4x8x128xf32> to vector<1x8x128xf32>
    %19 = arith.subf %17, %18 : vector<1x8x128xf32>
    %20 = arith.mulf %16, %19 : vector<1x8x128xf32>
    %21 = vector.extract_strided_slice %6 {offsets = [2, 0, 0], sizes = [1, 8, 128], strides = [1, 1, 1]} : vector<4x8x128xf32> to vector<1x8x128xf32>
    %22 = vector.extract_strided_slice %5 {offsets = [0, 0, 0], sizes = [1, 8, 128], strides = [1, 1, 1]} : vector<4x8x128xf32> to vector<1x8x128xf32>
    %23 = arith.subf %21, %22 : vector<1x8x128xf32>
    %cst = arith.constant 0.000000e+00 : f32
    %24 = vector.broadcast %cst : f32 to vector<1x8x128xf32>
    %25 = arith.maximumf %23, %24 : vector<1x8x128xf32>
    %26 = vector.extract_strided_slice %6 {offsets = [3, 0, 0], sizes = [1, 8, 128], strides = [1, 1, 1]} : vector<4x8x128xf32> to vector<1x8x128xf32>
    %27 = vector.extract_strided_slice %5 {offsets = [1, 0, 0], sizes = [1, 8, 128], strides = [1, 1, 1]} : vector<4x8x128xf32> to vector<1x8x128xf32>
    %28 = arith.subf %26, %27 : vector<1x8x128xf32>
    %cst_3 = arith.constant 0.000000e+00 : f32
    %29 = vector.broadcast %cst_3 : f32 to vector<1x8x128xf32>
    %30 = arith.maximumf %28, %29 : vector<1x8x128xf32>
    %31 = arith.mulf %25, %30 : vector<1x8x128xf32>
    %32 = arith.addf %13, %20 : vector<1x8x128xf32>
    %33 = arith.subf %32, %31 : vector<1x8x128xf32>
    %c1024_i32_4 = arith.constant 1024 : i32
    %34 = arith.addi %0, %c1024_i32_4 : i32
    %35 = arith.cmpi sle, %34, %1 : i32
    %36 = arith.extui %35 : i1 to i32
    %c0_i32 = arith.constant 0 : i32
    %37 = arith.cmpi ne, %36, %c0_i32 : i32
    scf.if %37 {
      %41 = arith.divf %31, %33 : vector<1x8x128xf32>
      %cst_6 = arith.constant dense<0.000000e+00> : vector<8x128xf32>
      %42 = vector.multi_reduction <add>, %41, %cst_6 [0] : vector<1x8x128xf32> to vector<8x128xf32>
      %43 = vector.shape_cast %42 : vector<8x128xf32> to vector<1x8x128xf32>
      %c0_7 = arith.constant 0 : index
      %c0_8 = arith.constant 0 : index
      %c0_9 = arith.constant 0 : index
      %44 = vector.load %arg3[%c0_7, %c0_8, %c0_9] : memref<1x8x128xf32, #tpu.memory_space<vmem>>, vector<1x8x128xf32>
      tpu.vector_store %arg3[%c0_7, %c0_8, %c0_9], %43 {strides = array<i32>} : memref<1x8x128xf32, #tpu.memory_space<vmem>>, vector<1x8x128xf32>,
    } else {
    }
    %true = arith.constant true
    %38 = arith.xori %35, %true : i1
    %39 = arith.extui %38 : i1 to i32
    %c0_i32_5 = arith.constant 0 : i32
    %40 = arith.cmpi ne, %39, %c0_i32_5 : i32
    scf.if %40 {
      %41 = tpu.iota {dimensions = array<i32: 1>} : vector<1x8x128xi32>
      %42 = tpu.iota {dimensions = array<i32: 2>} : vector<1x8x128xi32>
      %c128_i32 = arith.constant 128 : i32
      %43 = vector.broadcast %c128_i32 : i32 to vector<1x8x128xi32>
      %44 = arith.muli %41, %43 : vector<1x8x128xi32>
      %45 = vector.broadcast %0 : i32 to vector<1x8x128xi32>
      %46 = arith.addi %45, %44 : vector<1x8x128xi32>
      %47 = arith.addi %46, %42 : vector<1x8x128xi32>
      %48 = vector.broadcast %1 : i32 to vector<1x8x128xi32>
      %49 = arith.cmpi slt, %47, %48 : vector<1x8x128xi32>
      %cst_6 = arith.constant 1.000000e+00 : f32
      %50 = vector.broadcast %cst_6 : f32 to vector<1x8x128xf32>
      %51 = arith.select %49, %33, %50 : vector<1x8x128xi1>, vector<1x8x128xf32>
      %52 = arith.divf %31, %51 : vector<1x8x128xf32>
      %cst_7 = arith.constant 0.000000e+00 : f32
      %53 = vector.broadcast %cst_7 : f32 to vector<1x8x128xf32>
      %54 = arith.select %49, %52, %53 : vector<1x8x128xi1>, vector<1x8x128xf32>
      %cst_8 = arith.constant dense<0.000000e+00> : vector<8x128xf32>
      %55 = vector.multi_reduction <add>, %54, %cst_8 [0] : vector<1x8x128xf32> to vector<8x128xf32>
      %56 = vector.shape_cast %55 : vector<8x128xf32> to vector<1x8x128xf32>
      %c0_9 = arith.constant 0 : index
      %c0_10 = arith.constant 0 : index
      %c0_11 = arith.constant 0 : index
      %57 = vector.load %arg3[%c0_9, %c0_10, %c0_11] : memref<1x8x128xf32, #tpu.memory_space<vmem>>, vector<1x8x128xf32>
      tpu.vector_store %arg3[%c0_9, %c0_10, %c0_11], %56 {strides = array<i32>} : memref<1x8x128xf32, #tpu.memory_space<vmem>>, vector<1x8x128xf32>,
    } else {
    }
    return
  }
  func.func @transform_0(%arg0: i32, %arg1: memref<1xi32, #tpu.memory_space<smem>>) -> (i32, i32, i32) {
    %c0_i32 = arith.constant 0 : i32
    %c0_i32_0 = arith.constant 0 : i32
    %c0_i32_1 = arith.constant 0 : i32
    return %c0_i32, %arg0, %c0_i32_0 : i32, i32, i32
  }
  func.func @transform_1(%arg0: i32, %arg1: memref<1xi32, #tpu.memory_space<smem>>) -> (i32, i32, i32) {
    %c0_i32 = arith.constant 0 : i32
    %c0_i32_0 = arith.constant 0 : i32
    %c0_i32_1 = arith.constant 0 : i32
    return %arg0, %c0_i32, %c0_i32_0 : i32, i32, i32
  }
}

</mosaic_0001>

<llo_original>
// kernel: tpu_custom_call.1
$region0: #{tpu_custom_call.1}
  #allocation0 [shape = 'u32[]', space=smem, size = 0x4, offset = 0x4, fixed_abs, tag = 'smem constant byte address 0x4 - core index']
  #allocation1 [shape = 'u32[144,128]{1,0:T(1,128)}', space=vmem, size = 0x12000, scoped, tag = 'internal scratch']
  #allocation2 [shape = 's32[1]{0}', space=sflag, size = 0x4, scoped, tag = 'scoped memory for tpu_custom_call.1']
  #allocation3 [shape = 's32[1]{0:T(128)S(6)}', space=smem, size = 0x200, scoped, tag = 'prefetched SMEM operand 0']
  %s0 = inlined_call_operand.<no memory space> [shape: s32[1], index: 0, kind: input, shape index: {}]
  %s1 = inlined_call_operand.hbm [shape: f32[8,8,128], index: 1, kind: input, shape index: {}]
  %s2 = inlined_call_operand.hbm [shape: f32[1,8,128], index: 2, kind: output, shape index: {}]
  %s3 = sld [smem:[#allocation0]]
  $region26: #{tpu_custom_call.1} parent=0
    _
  %s5 = ssub.s32 1, %s3
  %s6 = scalar_select 0, %s5, %s3
  %7 = sst [smem:[#allocation3]] %s0
  $region1: #{tpu_custom_call.1} parent=0
    #allocation4 [shape = 'u8[32768]{0}', space=vmem, size = 0x8000, scoped, tag = 'input window, operand 1, single buffered']
    #allocation5 [shape = 's32[1]{0}', space=sflag, size = 0x4, scoped, tag = 'scoped memory for tpu_custom_call.1']
    #allocation6 [shape = 's32[1]{0}', space=sflag, size = 0x4, scoped, tag = 'scoped memory for tpu_custom_call.1']
    #allocation7 [shape = 'u8[4096]{0}', space=vmem, size = 0x1000, scoped, tag = 'output window, operand 0, single buffered']
    %8 = vsyncpa [#allocation5], 0
    %9 = vsyncpa [#allocation6], 0
    // Predicated region
    $region2: #{tpu_custom_call.1} parent=1 // pred_check
      _
    $region3: #{tpu_custom_call.1} parent=1 // pred_check_branch
      %11 = sbr.rel (0) target = $region5
    $region4: #{tpu_custom_call.1} parent=1 // pred_region
      %s13 = ssub.s32 1024, 1024
      %14 = vsyncadd [#allocation5], %s13
      %s15 = sshll.u32 [#allocation4], 4
      %s16 = int_to_ptr.vmem [resolvable:$true] %s15
      %21 = dma.hbm_to_vmem [thread:$0]  %s1, 1024, %s16, [#allocation5], 128, 128, 8
    $region5: #{tpu_custom_call.1} parent=1 // pred_fallthru
      _
    // Predicated region
    $region6: #{tpu_custom_call.1} parent=1 // pred_check
      _
    $region7: #{tpu_custom_call.1} parent=1 // pred_check_branch
      %23 = sbr.rel (0) target = $region9
    $region8: #{tpu_custom_call.1} parent=1 // pred_region
      %24 = dma.done [#allocation5], 1024
    $region9: #{tpu_custom_call.1} parent=1 // pred_fallthru
      _
    %s25 = smul.u32 0, 1024
    %s26 = sld [smem:[#allocation3]]
    %v27 = vld [vmem:[#allocation4] sm:$0xff]
    %v28 = vld [vmem:[#allocation4 + $0x8] sm:$0xff]
    %v29 = vld [vmem:[#allocation4 + $0x10] sm:$0xff]
    %v30 = vld [vmem:[#allocation4 + $0x18] sm:$0xff]
    %v31 = vld [vmem:[#allocation4 + $0x20] sm:$0xff]
    %v32 = vld [vmem:[#allocation4 + $0x28] sm:$0xff]
    %v33 = vld [vmem:[#allocation4 + $0x30] sm:$0xff]
    %v34 = vld [vmem:[#allocation4 + $0x38] sm:$0xff]
    %v35 = vmax.f32 %v27, %v31
    %v36 = vmax.f32 %v28, %v32
    %v37 = vmin.f32 %v29, %v33
    %v38 = vmin.f32 %v30, %v34
    %v39 = vsub.f32 %v29, %v27
    %v40 = vsub.f32 %v30, %v28
    %v41 = vmul.f32 %v39, %v40
    %v42 = vsub.f32 %v33, %v31
    %v43 = vsub.f32 %v34, %v32
    %v44 = vmul.f32 %v42, %v43
    %v45 = vsub.f32 %v37, %v35
    %v46 = vmax.f32 %v45, 0.0
    %v47 = vsub.f32 %v38, %v36
    %v48 = vmax.f32 %v47, 0.0
    %v49 = vmul.f32 %v46, %v48
    %v50 = vadd.f32 %v41, %v44
    %v51 = vsub.f32 %v50, %v49
    %s52 = sadd.s32 %s25, 1024
    %p53 = scmp.le.s32.totalorder %s52, %s26
    // Predicated region
    $region10: #{tpu_custom_call.1} parent=1 // pred_check
      %p54 = pneg %p53
    $region11: #{tpu_custom_call.1} parent=1 // pred_check_branch
      %56 = sbr.rel (%p54) target = $region13
    $region12: #{tpu_custom_call.1} parent=1 // pred_region
      %v57 = vrcp.pop %v51
      %v58 = vmul.f32 %v49, %v57
      %v59 = vadd.f32 %v58, 0.0
      %60 = vst [vmem:[#allocation7] sm:$0xff] %v59
    $region13: #{tpu_custom_call.1} parent=1 // pred_fallthru
      _
    %p61 = scmp.gt.s32.totalorder %s52, %s26
    // Predicated region
    $region14: #{tpu_custom_call.1} parent=1 // pred_check
      %p62 = pneg %p61
    $region15: #{tpu_custom_call.1} parent=1 // pred_check_branch
      %64 = sbr.rel (%p62) target = $region17
    $region16: #{tpu_custom_call.1} parent=1 // pred_region
      %v65 = vlaneseq
      %v66 = vshrl.u32 %v65, 7
      %v67 = vlaneseq
      %v68 = vand.u32 %v67, 127
      %v69 = vmul.u32 %v66, 128
      %v70 = vstv %s25
      %v71 = vadd.s32 %v70, %v69
      %v72 = vadd.s32 %v71, %v68
      %v73 = vstv %s26
      %vm74 = vcmp.lt.s32.totalorder %v72, %v73
      %v75 = vsel %vm74, %v51, 1.0
      %v76 = vrcp.pop %v75
      %v77 = vmul.f32 %v49, %v76
      %v78 = vsel %vm74, %v77, 0.0
      %v79 = vadd.f32 %v78, 0.0
      %80 = vst [vmem:[#allocation7] sm:$0xff] %v79
    $region17: #{tpu_custom_call.1} parent=1 // pred_fallthru
      _
    // Predicated region
    $region18: #{tpu_custom_call.1} parent=1 // pred_check
      _
    $region19: #{tpu_custom_call.1} parent=1 // pred_check_branch
      %82 = sbr.rel (0) target = $region21
    $region20: #{tpu_custom_call.1} parent=1 // pred_region
      %s84 = ssub.s32 128, 128
      %85 = vsyncadd [#allocation6], %s84
      %s87 = sshll.u32 [#allocation7], 4
      %s88 = int_to_ptr.vmem [resolvable:$true] %s87
      %90 = dma.vmem_to_hbm [thread:$0]  %s88, 128, %s2, [#allocation6]
    $region21: #{tpu_custom_call.1} parent=1 // pred_fallthru
      _
    // Predicated region
    $region22: #{tpu_custom_call.1} parent=1 // pred_check
      _
    $region23: #{tpu_custom_call.1} parent=1 // pred_check_branch
      %92 = sbr.rel (0) target = $region25
    $region24: #{tpu_custom_call.1} parent=1 // pred_region
      %93 = dma.done [#allocation6], 128
    $region25: #{tpu_custom_call.1} parent=1 // pred_fallthru
      _
    %94 = vsyncpa [#allocation5], 1
    %95 = vsyncpa [#allocation6], 1

</llo_original>
